<compile_context>
chip_gen: v7x
topology: tpu7x:2x2x1
jax: 0.10.0
libtpu: 0.0.40
codegen_flags: <defaults>
</compile_context>

<pallas_src>
import jax
import jax.numpy as jnp
from jax.experimental import pallas as pl
from jax.experimental.pallas import tpu as pltpu


def _pick_blocks(N, H, W, Cin, bytes_per_elem, budget_bytes):
    """Pick (images-per-step, rows-per-step) so one x block is <= budget_bytes,
    rows-per-step is even and divides H, images-per-step divides N, and the
    grid keeps at least 2 steps (pipeline overlap / v7x core balance)."""
    per_row = W * Cin * bytes_per_elem
    th = 2
    for cand in range(2, H + 1, 2):
        if H % cand == 0 and cand * per_row <= budget_bytes:
            th = cand
    img_bytes = th * per_row
    bn = 1
    for cand in range(2, N + 1):
        if N % cand != 0 or cand * img_bytes > budget_bytes:
            continue
        if (N // cand) * (H // th) >= 2:
            bn = cand
    return bn, th


def _transition_kernel(x_ref, scale_ref, shift_ref, w_ref, o_ref):
    # x_ref:    (BN, TH, W//2, 2*Cin)  bf16  (even/odd W columns merged into channels)
    # scale_ref:(1, 2*Cin) f32   gamma / sqrt(var+eps), duplicated for both W parities
    # shift_ref:(1, 2*Cin) f32   beta - mean * scale,   duplicated
    # w_ref:    (2*Cin, Cout) bf16   [w; w] * 0.25  (W pair-sum + 1/4 folded into K)
    # o_ref:    (BN, TH//2, W//2, Cout) bf16
    x = x_ref[...].astype(jnp.float32)                 # (BN, TH, Wh, 2C)
    BN, TH, Wh, C2 = x.shape
    Cout = w_ref.shape[1]

    scale = scale_ref[0]                               # (2C,) f32
    shift = shift_ref[0]

    # BatchNorm (inference) + ReLU, fused elementwise on the VPU in f32.
    y = jnp.maximum(x * scale + shift, 0.0)            # (BN, TH, Wh, 2C)

    # H-direction pool pair-sum: split a leading dim (free) + one plane add.
    yh = y.reshape(BN, TH // 2, 2, Wh, C2)
    pooled = yh[:, :, 0] + yh[:, :, 1]                 # (BN, TH//2, Wh, 2C)

    # W-direction pair-sum and the 1/4 factor are folded into the matmul:
    # K = 2*Cin with the weight stacked twice.  bf16 MXU inputs, f32 accumulate.
    # (Flatten is free when Wh is a multiple of 8 — true for CIFAR DenseNet.)
    a = pooled.reshape(BN * (TH // 2) * Wh, C2).astype(w_ref.dtype)
    z = jnp.dot(a, w_ref[...], preferred_element_type=jnp.float32)   # (M, Cout)

    o_ref[...] = z.reshape(BN, TH // 2, Wh, Cout).astype(o_ref.dtype)


def transition_forward(x_nchw, gamma, beta, running_mean, running_var,
                       conv_w, eps=1e-5, act_dtype=jnp.bfloat16,
                       matmul_dtype=jnp.bfloat16):
    """x_nchw: (N, Cin, H, W); conv_w: (Cout, Cin, 1, 1) PyTorch layout."""
    N, Cin, H, W = x_nchw.shape
    Cout = conv_w.shape[0]
    # TODO(synk): PyTorch avg_pool2d floors odd H/W; DenseNet transitions are even.
    assert H % 2 == 0 and W % 2 == 0, "avg_pool2d(2) expects even H, W here"

    Wh = W // 2
    C2 = 2 * Cin

    # Fold BN running stats into per-channel scale/shift (inference semantics),
    # duplicated so they apply to the merged (even-W, odd-W) channel layout.
    inv = (gamma / jnp.sqrt(running_var + eps)).astype(jnp.float32)
    sft = (beta - running_mean * inv).astype(jnp.float32)
    scale2 = jnp.concatenate([inv, inv]).reshape(1, C2)
    shift2 = jnp.concatenate([sft, sft]).reshape(1, C2)

    # 1x1 conv weight -> (Cin, Cout), stacked twice along K (W pair-sum) with
    # the 1/4 average-pool factor folded in; cast once to bf16 for the MXU.
    w = conv_w.reshape(Cout, Cin).T.astype(jnp.float32)
    w2 = (0.25 * jnp.concatenate([w, w], axis=0)).astype(matmul_dtype)   # (2C, Cout)

    # NCHW -> NHWC + cast to the activation dtype (one fused XLA pass), then a
    # metadata-only reshape merging each W pair into the channel dim.
    x_nhwc = jnp.transpose(x_nchw, (0, 2, 3, 1)).astype(act_dtype)
    x_m = x_nhwc.reshape(N, H, Wh, C2)

    act_bytes = jnp.dtype(act_dtype).itemsize
    bn_blk, th = _pick_blocks(N, H, W, Cin, act_bytes, budget_bytes=4 << 20)

    # VMEM budget: double-buffered in/out blocks + weights + in-kernel f32 set.
    x_blk = bn_blk * th * Wh * C2 * act_bytes
    o_blk = bn_blk * (th // 2) * Wh * Cout * act_bytes
    w_bytes = C2 * Cout * jnp.dtype(matmul_dtype).itemsize + 2 * C2 * 4
    scratch = (bn_blk * th * Wh * C2 * 4
               + bn_blk * (th // 2) * Wh * (C2 * 6 + Cout * 4))
    need = 2 * x_blk + 2 * o_blk + 2 * w_bytes + scratch
    vmem_limit = int(min(max(int(1.5 * need), 8 << 20), 32 << 20))

    out_nhwc = pl.pallas_call(
        _transition_kernel,
        out_shape=jax.ShapeDtypeStruct((N, H // 2, Wh, Cout), act_dtype),
        grid_spec=pltpu.PrefetchScalarGridSpec(
            num_scalar_prefetch=0,
            grid=(N // bn_blk, H // th),
            in_specs=[
                pl.BlockSpec((bn_blk, th, Wh, C2), lambda n, h: (n, h, 0, 0)),
                pl.BlockSpec((1, C2), lambda n, h: (0, 0)),
                pl.BlockSpec((1, C2), lambda n, h: (0, 0)),
                pl.BlockSpec((C2, Cout), lambda n, h: (0, 0)),
            ],
            out_specs=pl.BlockSpec((bn_blk, th // 2, Wh, Cout),
                                   lambda n, h: (n, h, 0, 0)),
        ),
        compiler_params=pltpu.CompilerParams(
            dimension_semantics=("parallel", "parallel"),
            vmem_limit_bytes=vmem_limit),
    )(x_m, scale2, shift2, w2)

    # NHWC -> NCHW and cast back to the caller's dtype (one fused XLA pass).
    return jnp.transpose(out_nhwc, (0, 3, 1, 2)).astype(x_nchw.dtype)


def _reference(x_nchw, gamma, beta, running_mean, running_var, conv_w, eps=1e-5):
    # Pure-JAX f32 reference (NCHW) for correctness checking.
    inv = gamma / jnp.sqrt(running_var + eps)
    xn = x_nchw * inv[None, :, None, None] \
        + (beta - running_mean * inv)[None, :, None, None]
    xr = jnp.maximum(xn, 0.0)
    w = conv_w.reshape(conv_w.shape[0], conv_w.shape[1])      # (Cout, Cin)
    conv = jnp.einsum('nchw,oc->nohw', xr, w)
    N, Co, H, W = conv.shape
    pooled = conv.reshape(N, Co, H // 2, 2, W // 2, 2).mean(axis=(3, 5))
    return pooled


if __name__ == "__main__":
    key = jax.random.PRNGKey(0)
    N, Cin, Cout, H, W = 2, 8, 4, 16, 16

    k = jax.random.split(key, 6)
    x = jax.random.normal(k[0], (N, Cin, H, W), dtype=jnp.float32)
    gamma = jax.random.normal(k[1], (Cin,), dtype=jnp.float32) * 0.1 + 1.0
    beta = jax.random.normal(k[2], (Cin,), dtype=jnp.float32) * 0.1
    running_mean = jax.random.normal(k[3], (Cin,), dtype=jnp.float32) * 0.1
    running_var = jax.random.uniform(k[4], (Cin,), dtype=jnp.float32,
                                     minval=0.5, maxval=1.5)
    conv_w = jax.random.normal(k[5], (Cout, Cin, 1, 1), dtype=jnp.float32) * 0.1

    out = transition_forward(x, gamma, beta, running_mean, running_var, conv_w)
    out = jax.block_until_ready(out)

    ref = _reference(x, gamma, beta, running_mean, running_var, conv_w)
    assert out.shape == (N, Cout, H // 2, W // 2)
    # bf16 activations + bf16 MXU inputs (f32 accumulate) -> relaxed tolerance.
    assert jnp.allclose(out, ref, atol=2e-2, rtol=2e-2)

    print("KERNEL_OK")
</pallas_src>

<mosaic_0001>
module attributes {stable_mosaic.version = 11 : i64} {
  func.func @_transition_kernel(%arg0: i32, %arg1: i32, %arg2: memref<1x16x8x16xbf16, #tpu.memory_space<vmem>>, %arg3: memref<1x16xf32, #tpu.memory_space<vmem>>, %arg4: memref<1x16xf32, #tpu.memory_space<vmem>>, %arg5: memref<16x4xbf16, #tpu.memory_space<vmem>>, %arg6: memref<1x8x8x4xbf16, #tpu.memory_space<vmem>>) attributes {dimension_semantics = [#tpu.dimension_semantics<parallel>, #tpu.dimension_semantics<parallel>], iteration_bounds = array<i64: 2, 1>, scalar_prefetch = 0 : i64, scratch_operands = 0 : i64, tpu.core_type = #tpu.core_type<tc>, window_params = [{transform_indices = @transform_0, window_bounds = array<i64: 1, 16, 8, 16>}, {pipeline_mode = #tpu.pipeline_mode<synchronous>, transform_indices = @transform_1, window_bounds = array<i64: 1, 16>}, {pipeline_mode = #tpu.pipeline_mode<synchronous>, transform_indices = @transform_2, window_bounds = array<i64: 1, 16>}, {pipeline_mode = #tpu.pipeline_mode<synchronous>, transform_indices = @transform_3, window_bounds = array<i64: 16, 4>}, {transform_indices = @transform_4, window_bounds = array<i64: 1, 8, 8, 4>}]} {
    %c0 = arith.constant 0 : index
    %c0_0 = arith.constant 0 : index
    %c0_1 = arith.constant 0 : index
    %c0_2 = arith.constant 0 : index
    %0 = vector.load %arg2[%c0, %c0_0, %c0_1, %c0_2] : memref<1x16x8x16xbf16, #tpu.memory_space<vmem>>, vector<1x16x8x16xbf16>
    %1 = arith.extf %0 : vector<1x16x8x16xbf16> to vector<1x16x8x16xf32>
    %c0_3 = arith.constant 0 : index
    %c0_4 = arith.constant 0 : index
    %2 = vector.load %arg3[%c0_3, %c0_4] : memref<1x16xf32, #tpu.memory_space<vmem>>, vector<1x16xf32>
    %3 = vector.shape_cast %2 : vector<1x16xf32> to vector<16xf32>
    %c0_5 = arith.constant 0 : index
    %c0_6 = arith.constant 0 : index
    %4 = vector.load %arg4[%c0_5, %c0_6] : memref<1x16xf32, #tpu.memory_space<vmem>>, vector<1x16xf32>
    %5 = vector.shape_cast %4 : vector<1x16xf32> to vector<16xf32>
    %6 = vector.shape_cast %3 : vector<16xf32> to vector<1x1x1x16xf32>
    %7 = vector.broadcast %6 : vector<1x1x1x16xf32> to vector<1x16x8x16xf32>
    %8 = arith.mulf %1, %7 : vector<1x16x8x16xf32>
    %9 = vector.shape_cast %5 : vector<16xf32> to vector<1x1x1x16xf32>
    %10 = vector.broadcast %9 : vector<1x1x1x16xf32> to vector<1x16x8x16xf32>
    %11 = arith.addf %8, %10 : vector<1x16x8x16xf32>
    %cst = arith.constant 0.000000e+00 : f32
    %12 = vector.broadcast %cst : f32 to vector<1x16x8x16xf32>
    %13 = arith.maximumf %11, %12 : vector<1x16x8x16xf32>
    %14 = vector.shape_cast %13 : vector<1x16x8x16xf32> to vector<1x8x2x8x16xf32>
    %15 = vector.extract_strided_slice %14 {offsets = [0, 0, 0, 0, 0], sizes = [1, 8, 1, 8, 16], strides = [1, 1, 1, 1, 1]} : vector<1x8x2x8x16xf32> to vector<1x8x1x8x16xf32>
    %16 = vector.shape_cast %15 : vector<1x8x1x8x16xf32> to vector<1x8x8x16xf32>
    %17 = vector.extract_strided_slice %14 {offsets = [0, 0, 1, 0, 0], sizes = [1, 8, 1, 8, 16], strides = [1, 1, 1, 1, 1]} : vector<1x8x2x8x16xf32> to vector<1x8x1x8x16xf32>
    %18 = vector.shape_cast %17 : vector<1x8x1x8x16xf32> to vector<1x8x8x16xf32>
    %19 = arith.addf %16, %18 : vector<1x8x8x16xf32>
    %20 = vector.shape_cast %19 : vector<1x8x8x16xf32> to vector<64x16xf32>
    %21 = arith.truncf %20 : vector<64x16xf32> to vector<64x16xbf16>
    %c0_7 = arith.constant 0 : index
    %c0_8 = arith.constant 0 : index
    %22 = vector.load %arg5[%c0_7, %c0_8] : memref<16x4xbf16, #tpu.memory_space<vmem>>, vector<16x4xbf16>
    %cst_9 = arith.constant dense<0.000000e+00> : vector<64x4xf32>
    %23 = tpu.matmul %21, %22, %cst_9 {dimension_numbers = #tpu.dot_dimension_numbers<[1], [0], [0], [1], [0, 0, 1, 1], [], []>} : vector<64x16xbf16>, vector<16x4xbf16>, vector<64x4xf32> -> vector<64x4xf32>
    %24 = vector.shape_cast %23 : vector<64x4xf32> to vector<1x8x8x4xf32>
    %25 = arith.truncf %24 : vector<1x8x8x4xf32> to vector<1x8x8x4xbf16>
    %c0_10 = arith.constant 0 : index
    %c0_11 = arith.constant 0 : index
    %c0_12 = arith.constant 0 : index
    %c0_13 = arith.constant 0 : index
    %26 = vector.load %arg6[%c0_10, %c0_11, %c0_12, %c0_13] : memref<1x8x8x4xbf16, #tpu.memory_space<vmem>>, vector<1x8x8x4xbf16>
    tpu.vector_store %arg6[%c0_10, %c0_11, %c0_12, %c0_13], %25 {strides = array<i32>} : memref<1x8x8x4xbf16, #tpu.memory_space<vmem>>, vector<1x8x8x4xbf16>,
    return
  }
  func.func @transform_0(%arg0: i32, %arg1: i32) -> (i32, i32, i32, i32) {
    %c0_i32 = arith.constant 0 : i32
    %c0_i32_0 = arith.constant 0 : i32
    %c0_i32_1 = arith.constant 0 : i32
    return %arg0, %arg1, %c0_i32, %c0_i32_0 : i32, i32, i32, i32
  }
  func.func @transform_1(%arg0: i32, %arg1: i32) -> (i32, i32) {
    %c0_i32 = arith.constant 0 : i32
    %c0_i32_0 = arith.constant 0 : i32
    %c0_i32_1 = arith.constant 0 : i32
    return %c0_i32, %c0_i32_0 : i32, i32
  }
  func.func @transform_2(%arg0: i32, %arg1: i32) -> (i32, i32) {
    %c0_i32 = arith.constant 0 : i32
    %c0_i32_0 = arith.constant 0 : i32
    %c0_i32_1 = arith.constant 0 : i32
    return %c0_i32, %c0_i32_0 : i32, i32
  }
  func.func @transform_3(%arg0: i32, %arg1: i32) -> (i32, i32) {
    %c0_i32 = arith.constant 0 : i32
    %c0_i32_0 = arith.constant 0 : i32
    %c0_i32_1 = arith.constant 0 : i32
    return %c0_i32, %c0_i32_0 : i32, i32
  }
  func.func @transform_4(%arg0: i32, %arg1: i32) -> (i32, i32, i32, i32) {
    %c0_i32 = arith.constant 0 : i32
    %c0_i32_0 = arith.constant 0 : i32
    %c0_i32_1 = arith.constant 0 : i32
    return %arg0, %arg1, %c0_i32, %c0_i32_0 : i32, i32, i32, i32
  }
}

</mosaic_0001>

<llo_original>
// kernel: tpu_custom_call.1
$region0: #{tpu_custom_call.1}
  #allocation0 [shape = 'u32[]', space=smem, size = 0x4, offset = 0x4, fixed_abs, tag = 'smem constant byte address 0x4 - core index']
  #allocation1 [shape = 'u32[144,128]{1,0:T(1,128)}', space=vmem, size = 0x12000, scoped, tag = 'internal scratch']
  %s0 = inlined_call_operand.hbm [shape: bf16[2,16,8,16], index: 0, kind: input, shape index: {}]
  %s1 = inlined_call_operand.vmem [shape: f32[1,16], index: 1, kind: input, shape index: {}]
  %s2 = inlined_call_operand.vmem [shape: f32[1,16], index: 2, kind: input, shape index: {}]
  %s3 = inlined_call_operand.vmem [shape: bf16[16,4], index: 3, kind: input, shape index: {}]
  %s4 = inlined_call_operand.vmem [shape: bf16[2,8,8,4], index: 4, kind: output, shape index: {}]
  %s5 = sld [smem:[#allocation0]]
  $region53: #{tpu_custom_call.1} parent=0
    _
  %s7 = ssub.s32 1, %s5
  %s8 = scalar_select 0, %s7, %s5
  $region1: #{tpu_custom_call.1} parent=0
    #allocation2 [shape = 'u8[65536]{0}', space=vmem, size = 0x10000, scoped, tag = 'input window, operand 0']
    #allocation3 [shape = 's32[2]{0}', space=sflag, size = 0x8, scoped, tag = 'scoped memory for tpu_custom_call.1']
    %9 = vsyncpa [#allocation3], 0
    %s10 = scalar_lea.sflag [#allocation3], 1
    %11 = vsyncpa %s10, 0
    loop: start=0, step=1, limit=4
    $region2: #{tpu_custom_call.1} parent=1 // loop_pre_header
      _
    $region3: #{tpu_custom_call.1} parent=1 // loop_header
      %s13 = sphi 0, %s17
      %p14 = scmp.ge.s32.totalorder %s13, 4
      %s20 = sphi 0, %s32
      %s21 = sphi 0, %s28
      %s22 = sphi 0, %s20
      %s23 = sphi 0, %s21
      %s24 = sphi 0, %s22
      %s25 = sphi 0, %s23
      %s37 = sphi 0, %s39
      %s40 = sphi 0, %s37
      %s41 = sphi 0, %s40
      %s57 = sphi 0, %s41
      %s61 = sphi 0, %s61
      %s63 = sphi 0, %s61
      %s64 = sphi 0, %s63
      %s78 = sphi 0, %s64
      %s82 = sphi 0, %s82
      %s84 = sphi 0, %s82
      %s85 = sphi 0, %s84
      %s99 = sphi 0, %s85
      %s103 = sphi 0, %s103
      %s105 = sphi 0, %s103
      %s106 = sphi 0, %s105
      %s120 = sphi 0, %s106
      %s128 = sphi 0, %s130
      %s131 = sphi 0, %s128
      %s132 = sphi 0, %s131
      %s148 = sphi 0, %s132
    $region4: #{tpu_custom_call.1} parent=1 // loop_header_branch
      %16 = sbr.rel (%p14) target = $region8
    $region5: #{tpu_custom_call.1} parent=1 // loop_body
      %s18 = ssub.s32 %s13, 1
      %s19 = ssub.s32 %s13, 2
      %s26 = sadd.s32 1, %s21
      %p27 = scmp.ge.s32.totalorder %s26, 1
      %s28 = scalar_select %p27, 0, %s26
      %s29 = sadd.s32 1, %s20
      %s30 = scalar_select %p27, %s29, %s20
      %p31 = scmp.ge.s32.totalorder %s30, 2
      %s32 = scalar_select %p31, 0, %s30
      %s33 = ssub.s32 %s20, %s32
      %s34 = ssub.s32 %s21, %s28
      %s35 = sor.u32 %s33, %s34
      %p36 = scmp.eq.s32.totalorder %s35, 0
      %s38 = sadd.s32 %s37, 1
      %s39 = scalar_select %p36, %s37, %s38
      %p42 = pneg %p36
      %p43 = scmp.eq.s32.totalorder %s13, 1
      %p44 = por %p42, %p43
      %p45 = scmp.ne.s32.totalorder %s37, %s40
      %p46 = scmp.eq.s32.totalorder %s13, 0
      %p47 = por %p45, %p46
      %p48 = scmp.ne.s32.totalorder %s37, %s40
      %p49 = scmp.eq.s32.totalorder %s18, 1
      %p50 = por %p48, %p49
      %p51 = scmp.ne.s32.totalorder %s40, %s41
      %p52 = scmp.eq.s32.totalorder %s18, 0
      %p53 = por %p51, %p52
      %p54 = scmp.ne.s32.totalorder %s40, %s41
      %p55 = scmp.eq.s32.totalorder %s19, 1
      %p56 = por %p54, %p55
      %p58 = scmp.ne.s32.totalorder %s41, %s57
      %p59 = scmp.eq.s32.totalorder %s19, 0
      %p60 = por %p58, %p59
      %s62 = sadd.s32 %s61, 1
      %p65 = scmp.eq.s32.totalorder %s13, 1
      %p66 = scmp.ne.s32.totalorder %s61, %s63
      %p67 = scmp.eq.s32.totalorder %s13, 0
      %p68 = por %p66, %p67
      %p69 = scmp.ne.s32.totalorder %s61, %s63
      %p70 = scmp.eq.s32.totalorder %s18, 1
      %p71 = por %p69, %p70
      %p72 = scmp.ne.s32.totalorder %s63, %s64
      %p73 = scmp.eq.s32.totalorder %s18, 0
      %p74 = por %p72, %p73
      %p75 = scmp.ne.s32.totalorder %s63, %s64
      %p76 = scmp.eq.s32.totalorder %s19, 1
      %p77 = por %p75, %p76
      %p79 = scmp.ne.s32.totalorder %s64, %s78
      %p80 = scmp.eq.s32.totalorder %s19, 0
      %p81 = por %p79, %p80
      %s83 = sadd.s32 %s82, 1
      %p86 = scmp.eq.s32.totalorder %s13, 1
      %p87 = scmp.ne.s32.totalorder %s82, %s84
      %p88 = scmp.eq.s32.totalorder %s13, 0
      %p89 = por %p87, %p88
      %p90 = scmp.ne.s32.totalorder %s82, %s84
      %p91 = scmp.eq.s32.totalorder %s18, 1
      %p92 = por %p90, %p91
      %p93 = scmp.ne.s32.totalorder %s84, %s85
      %p94 = scmp.eq.s32.totalorder %s18, 0
      %p95 = por %p93, %p94
      %p96 = scmp.ne.s32.totalorder %s84, %s85
      %p97 = scmp.eq.s32.totalorder %s19, 1
      %p98 = por %p96, %p97
      %p100 = scmp.ne.s32.totalorder %s85, %s99
      %p101 = scmp.eq.s32.totalorder %s19, 0
      %p102 = por %p100, %p101
      %s104 = sadd.s32 %s103, 1
      %p107 = scmp.eq.s32.totalorder %s13, 1
      %p108 = scmp.ne.s32.totalorder %s103, %s105
      %p109 = scmp.eq.s32.totalorder %s13, 0
      %p110 = por %p108, %p109
      %p111 = scmp.ne.s32.totalorder %s103, %s105
      %p112 = scmp.eq.s32.totalorder %s18, 1
      %p113 = por %p111, %p112
      %p114 = scmp.ne.s32.totalorder %s105, %s106
      %p115 = scmp.eq.s32.totalorder %s18, 0
      %p116 = por %p114, %p115
      %p117 = scmp.ne.s32.totalorder %s105, %s106
      %p118 = scmp.eq.s32.totalorder %s19, 1
      %p119 = por %p117, %p118
      %p121 = scmp.ne.s32.totalorder %s106, %s120
      %p122 = scmp.eq.s32.totalorder %s19, 0
      %p123 = por %p121, %p122
      %s124 = ssub.s32 %s20, %s32
      %s125 = ssub.s32 %s21, %s28
      %s126 = sor.u32 %s124, %s125
      %p127 = scmp.eq.s32.totalorder %s126, 0
      %s129 = sadd.s32 %s128, 1
      %s130 = scalar_select %p127, %s128, %s129
      %p133 = pneg %p127
      %p134 = scmp.eq.s32.totalorder %s13, 1
      %p135 = por %p133, %p134
      %p136 = scmp.ne.s32.totalorder %s128, %s131
      %p137 = scmp.eq.s32.totalorder %s13, 0
      %p138 = por %p136, %p137
      %p139 = scmp.ne.s32.totalorder %s128, %s131
      %p140 = scmp.eq.s32.totalorder %s18, 1
      %p141 = por %p139, %p140
      %p142 = scmp.ne.s32.totalorder %s131, %s132
      %p143 = scmp.eq.s32.totalorder %s18, 0
      %p144 = por %p142, %p143
      %p145 = scmp.ne.s32.totalorder %s131, %s132
      %p146 = scmp.eq.s32.totalorder %s19, 1
      %p147 = por %p145, %p146
      %p149 = scmp.ne.s32.totalorder %s132, %s148
      %p150 = scmp.eq.s32.totalorder %s19, 0
      %p151 = por %p149, %p150
      %p152 = scmp.le.s32.totalorder 1, %s13
      %p153 = scmp.lt.s32.totalorder %s13, 3
      %p154 = pnand %p152, %p153
      %p155 = pneg %p154
      // Predicated region
      $region9: #{tpu_custom_call.1} parent=5 // pred_check
        _
      $region10: #{tpu_custom_call.1} parent=5 // pred_check_branch
        %157 = sbr.rel (%p154) target = $region12
      $region11: #{tpu_custom_call.1} parent=5 // pred_region
        %s158 = ssub.s32 %s13, 1
        // Predicated region
        $region13: #{tpu_custom_call.1} parent=11 // pred_check
          %p159 = pneg %p74
        $region14: #{tpu_custom_call.1} parent=11 // pred_check_branch
          %161 = sbr.rel (%p159) target = $region16
        $region15: #{tpu_custom_call.1} parent=11 // pred_region
          _
        $region16: #{tpu_custom_call.1} parent=11 // pred_fallthru
          _
        // Predicated region
        $region17: #{tpu_custom_call.1} parent=11 // pred_check
          %p162 = pneg %p95
        $region18: #{tpu_custom_call.1} parent=11 // pred_check_branch
          %164 = sbr.rel (%p162) target = $region20
        $region19: #{tpu_custom_call.1} parent=11 // pred_region
          _
        $region20: #{tpu_custom_call.1} parent=11 // pred_fallthru
          _
        // Predicated region
        $region21: #{tpu_custom_call.1} parent=11 // pred_check
          %p165 = pneg %p116
        $region22: #{tpu_custom_call.1} parent=11 // pred_check_branch
          %167 = sbr.rel (%p165) target = $region24
        $region23: #{tpu_custom_call.1} parent=11 // pred_region
          _
        $region24: #{tpu_custom_call.1} parent=11 // pred_fallthru
          _
      $region12: #{tpu_custom_call.1} parent=5 // pred_fallthru
        _
      %p168 = scmp.lt.s32.totalorder %s13, 2
      // Predicated region
      $region25: #{tpu_custom_call.1} parent=5 // pred_check
        %p169 = pneg %p168
      $region26: #{tpu_custom_call.1} parent=5 // pred_check_branch
        %171 = sbr.rel (%p169) target = $region28
      $region27: #{tpu_custom_call.1} parent=5 // pred_region
        // Predicated region
        $region29: #{tpu_custom_call.1} parent=27 // pred_check
          %p172 = pneg %p47
        $region30: #{tpu_custom_call.1} parent=27 // pred_check_branch
          %174 = sbr.rel (%p172) target = $region32
        $region31: #{tpu_custom_call.1} parent=27 // pred_region
          %s175 = sand.u32 %s37, 1
          %s176 = scalar_lea.sflag [#allocation3], %s175
          %s177 = sand.u32 %s37, 1
          %s178 = smul.addr %s177, 64
          %s179 = scalar_lea.vmem [#allocation2], %s178
          %s180 = smul.u32 16, %s21
          %s182 = ssub.s32 1024, 1024
          %183 = vsyncadd %s176, %s182
          %s184 = smul.addr %s20, 16
          %s185 = sadd.s32 %s180, %s184
          %s186 = smul.addr %s185, 64
          %s187 = scalar_lea.hbm %s0, %s186
          %s188 = sshll.u32 %s179, 4
          %s189 = int_to_ptr.vmem [resolvable:$true] %s188
          %194 = dma.hbm_to_vmem [thread:$0]  %s187, 1024, %s189, %s176, 64, 64, 4
        $region32: #{tpu_custom_call.1} parent=27 // pred_fallthru
          _
      $region28: #{tpu_custom_call.1} parent=5 // pred_fallthru
        _
      %p195 = scmp.le.s32.totalorder 1, %s13
      %p196 = scmp.lt.s32.totalorder %s13, 3
      %p197 = pnand %p195, %p196
      %p198 = pneg %p197
      // Predicated region
      $region33: #{tpu_custom_call.1} parent=5 // pred_check
        _
      $region34: #{tpu_custom_call.1} parent=5 // pred_check_branch
        %200 = sbr.rel (%p197) target = $region36
      $region35: #{tpu_custom_call.1} parent=5 // pred_region
        %s201 = ssub.s32 %s13, 1
        %s202 = sand.u32 %s40, 1
        %s203 = scalar_lea.sflag [#allocation3], %s202
        %s204 = sand.u32 %s40, 1
        %s205 = smul.addr %s204, 64
        %s206 = scalar_lea.vmem [#allocation2], %s205
        // Predicated region
        $region37: #{tpu_custom_call.1} parent=35 // pred_check
          %p207 = pneg %p53
        $region38: #{tpu_custom_call.1} parent=35 // pred_check_branch
          %209 = sbr.rel (%p207) target = $region40
        $region39: #{tpu_custom_call.1} parent=35 // pred_region
          %210 = dma.done %s203, 1024
        $region40: #{tpu_custom_call.1} parent=35 // pred_fallthru
          _
        %s211 = sand.u32 %s40, 1
        %s212 = scalar_lea.sflag [#allocation3], %s211
        %s213 = sand.u32 %s40, 1
        %s214 = smul.addr %s213, 64
        %s215 = scalar_lea.vmem [#allocation2], %s214
        %p216 = pneg %p53
        %p217 = pneg %p50
        %p218 = pneg %p74
        %p219 = pneg %p71
        %p220 = pneg %p95
        %p221 = pneg %p92
        %p222 = pneg %p116
        %p223 = pneg %p113
        %p224 = pneg %p144
        %p225 = pneg %p141
        %s226 = smul.u32 8, %s23
        %p227 = scmp.lt.s32.totalorder %s22, 1
        %s228 = scalar_select %p227, %s22, 1
        %p229 = scmp.lt.s32.totalorder %s226, 7
        %s230 = scalar_select %p229, %s226, 7
        %s231 = smul.addr %s228, 8
        %s232 = sadd.s32 %s230, %s231
        %s233 = smul.addr %s232, 4
        %s234 = scalar_lea.vmem %s4, %s233
        %s235 = smul.u32 16, %s23
        %s236 = smul.u32 8, %s23
        %p237 = scmp.lt.s32.totalorder %s22, 1
        %s238 = scalar_select %p237, %s22, 1
        %p239 = scmp.lt.s32.totalorder %s236, 7
        %s240 = scalar_select %p239, %s236, 7
        %s241 = smul.addr %s238, 8
        %s242 = sadd.s32 %s240, %s241
        %s243 = smul.addr %s242, 4
        %s244 = scalar_lea.vmem %s4, %s243
        %s245 = smul.u32 8, %s23
        %v247 = vld [vmem:[%s206] sm:$0xf]
        %v248 = vld [vmem:[%s206 + $0x4] sm:$0xf]
        %v249 = vld [vmem:[%s206 + $0x8] sm:$0xf]
        %v250 = vld [vmem:[%s206 + $0xc] sm:$0xf]
        %v251 = vld [vmem:[%s206 + $0x10] sm:$0xf]
        %v252 = vld [vmem:[%s206 + $0x14] sm:$0xf]
        %v253 = vld [vmem:[%s206 + $0x18] sm:$0xf]
        %v254 = vld [vmem:[%s206 + $0x1c] sm:$0xf]
        %v255 = vld [vmem:[%s206 + $0x20] sm:$0xf]
        %v256 = vld [vmem:[%s206 + $0x24] sm:$0xf]
        %v257 = vld [vmem:[%s206 + $0x28] sm:$0xf]
        %v258 = vld [vmem:[%s206 + $0x2c] sm:$0xf]
        %v259 = vld [vmem:[%s206 + $0x30] sm:$0xf]
        %v260 = vld [vmem:[%s206 + $0x34] sm:$0xf]
        %v261 = vld [vmem:[%s206 + $0x38] sm:$0xf]
        %v262 = vld [vmem:[%s206 + $0x3c] sm:$0xf]
        %v263 = vunpack.c.l.bf16 %v247
        %v264 = vunpack.c.l.bf16 %v248
        %v265 = vunpack.c.l.bf16 %v249
        %v266 = vunpack.c.l.bf16 %v250
        %v267 = vunpack.c.l.bf16 %v251
        %v268 = vunpack.c.l.bf16 %v252
        %v269 = vunpack.c.l.bf16 %v253
        %v270 = vunpack.c.l.bf16 %v254
        %v271 = vunpack.c.l.bf16 %v255
        %v272 = vunpack.c.l.bf16 %v256
        %v273 = vunpack.c.l.bf16 %v257
        %v274 = vunpack.c.l.bf16 %v258
        %v275 = vunpack.c.l.bf16 %v259
        %v276 = vunpack.c.l.bf16 %v260
        %v277 = vunpack.c.l.bf16 %v261
        %v278 = vunpack.c.l.bf16 %v262
        %v279 = vld [vmem:[%s1] sm:$0x1]
        %v280 = vld [vmem:[%s2] sm:$0x1]
        %v282 = vlaneseq
        %v283 = vshrl.u32 %v282, 7
        %v284 = vsub.s32 0, %v283
        %v285 = vrot.slane %v279, %v284
        %v287 = vmul.f32 %v263, %v285
        %v288 = vmul.f32 %v264, %v285
        %v289 = vmul.f32 %v265, %v285
        %v290 = vmul.f32 %v266, %v285
        %v291 = vmul.f32 %v267, %v285
        %v292 = vmul.f32 %v268, %v285
        %v293 = vmul.f32 %v269, %v285
        %v294 = vmul.f32 %v270, %v285
        %v295 = vmul.f32 %v271, %v285
        %v296 = vmul.f32 %v272, %v285
        %v297 = vmul.f32 %v273, %v285
        %v298 = vmul.f32 %v274, %v285
        %v299 = vmul.f32 %v275, %v285
        %v300 = vmul.f32 %v276, %v285
        %v301 = vmul.f32 %v277, %v285
        %v302 = vmul.f32 %v278, %v285
        %v304 = vlaneseq
        %v305 = vshrl.u32 %v304, 7
        %v306 = vsub.s32 0, %v305
        %v307 = vrot.slane %v280, %v306
        %v309 = vadd.f32 %v287, %v307
        %v310 = vadd.f32 %v288, %v307
        %v311 = vadd.f32 %v289, %v307
        %v312 = vadd.f32 %v290, %v307
        %v313 = vadd.f32 %v291, %v307
        %v314 = vadd.f32 %v292, %v307
        %v315 = vadd.f32 %v293, %v307
        %v316 = vadd.f32 %v294, %v307
        %v317 = vadd.f32 %v295, %v307
        %v318 = vadd.f32 %v296, %v307
        %v319 = vadd.f32 %v297, %v307
        %v320 = vadd.f32 %v298, %v307
        %v321 = vadd.f32 %v299, %v307
        %v322 = vadd.f32 %v300, %v307
        %v323 = vadd.f32 %v301, %v307
        %v324 = vadd.f32 %v302, %v307
        %v325 = vmax.f32 %v309, 0.0
        %v326 = vmax.f32 %v310, 0.0
        %v327 = vmax.f32 %v311, 0.0
        %v328 = vmax.f32 %v312, 0.0
        %v329 = vmax.f32 %v313, 0.0
        %v330 = vmax.f32 %v314, 0.0
        %v331 = vmax.f32 %v315, 0.0
        %v332 = vmax.f32 %v316, 0.0
        %v333 = vmax.f32 %v317, 0.0
        %v334 = vmax.f32 %v318, 0.0
        %v335 = vmax.f32 %v319, 0.0
        %v336 = vmax.f32 %v320, 0.0
        %v337 = vmax.f32 %v321, 0.0
        %v338 = vmax.f32 %v322, 0.0
        %v339 = vmax.f32 %v323, 0.0
        %v340 = vmax.f32 %v324, 0.0
        %v341 = vadd.f32 %v325, %v326
        %v342 = vadd.f32 %v327, %v328
        %v343 = vadd.f32 %v329, %v330
        %v344 = vadd.f32 %v331, %v332
        %v345 = vadd.f32 %v333, %v334
        %v346 = vadd.f32 %v335, %v336
        %v347 = vadd.f32 %v337, %v338
        %v348 = vadd.f32 %v339, %v340
        %v349 = vpack.c.bf16 %v342, %v341
        %v350 = vpack.c.bf16 %v344, %v343
        %v351 = vpack.c.bf16 %v346, %v345
        %v352 = vpack.c.bf16 %v348, %v347
        %v353 = vld [vmem:[%s3] sm:$0xf]
        %v354 = vld [vmem:[%s3 + $0x4] sm:$0xf]
        %v357 = vunpack.c.l.b16 %v353
        %v358 = vunpack.c.l.b16 %v354
        %v359 = vpack.c.b16 %v358, %v357
        %vm361 = vcmask 130048
        %v363 = vsel %vm361, %v349, 0
        %v366 = vsel %vm361, %v350, 0
        %v369 = vsel %vm361, %v351, 0
        %v372 = vsel %vm361, %v352, 0
        %374 = vmatprep.subr.bf16.mxu0 0
        %375 = vmatpush1.bf16.msra.mxu0 %v359
        %376 = vmatprep.subr.bf16.mxu0 0
        %377 = vmatpush1.bf16.msra.mxu0 0
        %378 = vmatprep.subr.bf16.mxu0 0
        %379 = vmatpush1.bf16.msra.mxu0 0
        %380 = vmatprep.subr.bf16.mxu0 0
        %381 = vmatpush1.bf16.msra.mxu0 0
        %382 = vmatprep.subr.bf16.mxu0 0
        %383 = vmatpush1.bf16.msra.mxu0 0
        %384 = vmatprep.subr.bf16.mxu0 0
        %385 = vmatpush1.bf16.msra.mxu0 0
        %386 = vmatprep.subr.bf16.mxu0 0
        %387 = vmatpush1.bf16.msra.mxu0 0
        %388 = vmatprep.subr.bf16.mxu0 0
        %389 = vmatpush1.bf16.msra.mxu0 0
        %390 = vmatprep.subr.bf16.mxu0 0
        %391 = vmatpush1.bf16.msra.mxu0 0
        %392 = vmatprep.subr.bf16.mxu0 0
        %393 = vmatpush1.bf16.msra.mxu0 0
        %394 = vmatprep.subr.bf16.mxu0 0
        %395 = vmatpush1.bf16.msra.mxu0 0
        %396 = vmatprep.subr.bf16.mxu0 0
        %397 = vmatpush1.bf16.msra.mxu0 0
        %398 = vmatprep.subr.bf16.mxu0 0
        %399 = vmatpush1.bf16.msra.mxu0 0
        %400 = vmatprep.subr.bf16.mxu0 0
        %401 = vmatpush1.bf16.msra.mxu0 0
        %402 = vmatprep.subr.bf16.mxu0 0
        %403 = vmatpush1.bf16.msra.mxu0 0
        %404 = vmatprep.subr.bf16.mxu0 0
        %405 = vmatpush1.bf16.msra.mxu0 0
        %406 = vmatprep.mubr.bf16.mxu0 0
        %407 = vmatmul.mubr.bf16.gmra.mrb[0].mxu0 %v363
        %v408 = vpop.f32.mrb[0].mxu0
        %v409 = vadd.f32 0.0, %v408
        %v410 = vpop.f32.mrb[0].mxu0
        %v411 = vpop.f32.mrb[0].mxu0
        %v412 = vadd.f32 0.0, %v411
        %v413 = vpop.f32.mrb[0].mxu0
        %414 = vmatprep.mubr.bf16.mxu0 0
        %415 = vmatmul.mubr.bf16.gmra.mrb[0].mxu0 %v366
        %v416 = vpop.f32.mrb[0].mxu0
        %v417 = vadd.f32 0.0, %v416
        %v418 = vpop.f32.mrb[0].mxu0
        %v419 = vpop.f32.mrb[0].mxu0
        %v420 = vadd.f32 0.0, %v419
        %v421 = vpop.f32.mrb[0].mxu0
        %422 = vmatprep.mubr.bf16.mxu0 0
        %423 = vmatmul.mubr.bf16.gmra.mrb[0].mxu0 %v369
        %v424 = vpop.f32.mrb[0].mxu0
        %v425 = vadd.f32 0.0, %v424
        %v426 = vpop.f32.mrb[0].mxu0
        %v427 = vpop.f32.mrb[0].mxu0
        %v428 = vadd.f32 0.0, %v427
        %v429 = vpop.f32.mrb[0].mxu0
        %430 = vmatprep.mubr.bf16.mxu0 0
        %431 = vmatmul.mubr.bf16.gmra.mrb[0].mxu0 %v372
        %v432 = vpop.f32.mrb[0].mxu0
        %v433 = vadd.f32 0.0, %v432
        %v434 = vpop.f32.mrb[0].mxu0
        %v435 = vpop.f32.mrb[0].mxu0
        %v436 = vadd.f32 0.0, %v435
        %v437 = vpop.f32.mrb[0].mxu0
        %438 = vdwg.mxu0
        %v439 = vpack.c.bf16 %v409, %v409
        %v440 = vpack.c.bf16 %v412, %v412
        %v441 = vpack.c.bf16 %v417, %v417
        %v442 = vpack.c.bf16 %v420, %v420
        %v443 = vpack.c.bf16 %v425, %v425
        %v444 = vpack.c.bf16 %v428, %v428
        %v445 = vpack.c.bf16 %v433, %v433
        %v446 = vpack.c.bf16 %v436, %v436
        %vm447 = vcmask 27648
        %448 = vst.msk [vmem:[%s244] sm:$0xf] %vm447, %v439
        %449 = vst.msk [vmem:[%s244 + $0x4] sm:$0xf] %vm447, %v440
        %450 = vst.msk [vmem:[%s244 + $0x8] sm:$0xf] %vm447, %v441
        %451 = vst.msk [vmem:[%s244 + $0xc] sm:$0xf] %vm447, %v442
        %452 = vst.msk [vmem:[%s244 + $0x10] sm:$0xf] %vm447, %v443
        %453 = vst.msk [vmem:[%s244 + $0x14] sm:$0xf] %vm447, %v444
        %454 = vst.msk [vmem:[%s244 + $0x18] sm:$0xf] %vm447, %v445
        %455 = vst.msk [vmem:[%s244 + $0x1c] sm:$0xf] %vm447, %v446
        %s456 = smul.u32 8, %s23
        %p457 = scmp.lt.s32.totalorder %s22, 1
        %s458 = scalar_select %p457, %s22, 1
        %p459 = scmp.lt.s32.totalorder %s456, 7
        %s460 = scalar_select %p459, %s456, 7
        %s461 = smul.addr %s458, 8
        %s462 = sadd.s32 %s460, %s461
        %s463 = smul.addr %s462, 4
        %s464 = scalar_lea.vmem %s4, %s463
        // Predicated region
        $region41: #{tpu_custom_call.1} parent=35 // pred_check
          %p465 = pneg %p141
        $region42: #{tpu_custom_call.1} parent=35 // pred_check_branch
          %467 = sbr.rel (%p465) target = $region44
        $region43: #{tpu_custom_call.1} parent=35 // pred_region
          %s468 = smul.u32 8, %s23
        $region44: #{tpu_custom_call.1} parent=35 // pred_fallthru
          _
      $region36: #{tpu_custom_call.1} parent=5 // pred_fallthru
        _
      %p469 = scmp.le.s32.totalorder 2, %s13
      // Predicated region
      $region45: #{tpu_custom_call.1} parent=5 // pred_check
        %p470 = pneg %p469
      $region46: #{tpu_custom_call.1} parent=5 // pred_check_branch
        %472 = sbr.rel (%p470) target = $region48
      $region47: #{tpu_custom_call.1} parent=5 // pred_region
        %s473 = ssub.s32 %s13, 2
        // Predicated region
        $region49: #{tpu_custom_call.1} parent=47 // pred_check
          %p474 = pneg %p147
        $region50: #{tpu_custom_call.1} parent=47 // pred_check_branch
          %476 = sbr.rel (%p474) target = $region52
        $region51: #{tpu_custom_call.1} parent=47 // pred_region
          %s477 = smul.u32 8, %s25
          %p478 = scmp.lt.s32.totalorder %s24, 1
          %s479 = scalar_select %p478, %s24, 1
          %p480 = scmp.lt.s32.totalorder %s477, 7
          %s481 = scalar_select %p480, %s477, 7
          %s482 = smul.addr %s479, 8
          %s483 = sadd.s32 %s481, %s482
          %s484 = smul.addr %s483, 4
          %s485 = scalar_lea.vmem %s4, %s484
        $region52: #{tpu_custom_call.1} parent=47 // pred_fallthru
          _
      $region48: #{tpu_custom_call.1} parent=5 // pred_fallthru
        _
    $region6: #{tpu_custom_call.1} parent=1 // loop_footer
      %s17 = sadd.s32 1, %s13
    $region7: #{tpu_custom_call.1} parent=1 // loop_footer_branch
      %12 = sbr.rel target = $region3
    $region8: #{tpu_custom_call.1} parent=1 // loop_exit
      _
    %486 = vsyncpa [#allocation3], 1
    %s487 = scalar_lea.sflag [#allocation3], 1
    %488 = vsyncpa %s487, 1

</llo_original>
